<compile_context>
chip_gen: v7x
topology: tpu7x:2x2x1
jax: 0.10.0
libtpu: 0.0.40
codegen_flags: <defaults>
</compile_context>

<pallas_src>
import numpy as np
import jax
import jax.numpy as jnp
from jax.experimental import pallas as pl
from jax.experimental.pallas import tpu as pltpu


def fused_model_kernel(xpad_ref, w1_ref, w2_ref, out_ref, v2pad_ref):
    # xpad_ref : (18, 18) f32 VMEM  - 16x16 input zero-padded by k1-1-p1 = 1
    # w1_ref   : (32,)    f32 SMEM  - raw conv_t1 weight, flat idx co*16+kh*4+kw
    # w2_ref   : (12,)    f32 SMEM  - raw conv_t2 weight, flat idx co*6+kh
    # out_ref  : (2, 2, 20, 15) f32 VMEM - sigmoid(conv_t2(sigmoid(conv_t1(x))))
    # v2pad_ref: (2, 28, 15) f32 VMEM scratch - stage-1 result zero-padded for
    #   stage 2.  The "virtual" padded map has 25 rows (5 zeros|15 data|5 zeros);
    #   data is placed at the sublane-aligned physical row 8 (virtual row r ->
    #   physical row r+3) so the store stays tile-aligned and stage-2 reads use
    #   physical rows [3+kh, 23+kh).

    # Zero the padded intermediate once (covers both padding bands).
    v2pad_ref[...] = jnp.zeros_like(v2pad_ref)

    # ---- stage 1: ConvTranspose2d(1->2, k=4, s=1, p=2) + sigmoid ----
    # flip folded into static indices: wflip[co,kh,kw] = w1[co, 3-kh, 3-kw]
    acc1 = [jnp.zeros((15, 15), jnp.float32) for _ in range(2)]
    for kh in range(4):
        for kw in range(4):
            win = xpad_ref[kh:kh + 15, kw:kw + 15]     # one load per tap window
            for co in range(2):
                acc1[co] = acc1[co] + win * w1_ref[co * 16 + (3 - kh) * 4 + (3 - kw)]
    for co in range(2):
        # TODO(synk): the original module feeds this 2-channel tensor into a
        # ConvTranspose2d declared with in_channels=1 (PyTorch raises at
        # runtime); we fold the channel dim into batch ((1,2,H,W)->(2,1,H,W))
        # so the declared weight shape is kept and the graph is well-defined.
        v2pad_ref[co, 8:23, :] = jax.nn.sigmoid(acc1[co])

    # ---- stage 2: ConvTranspose2d(1->2, k=(6,1), s=1, p=0) + sigmoid ----
    # flip folded into static indices: wflip[co,kh] = w2[co, 5-kh]
    for n in range(2):                                  # n = folded stage-1 channel
        acc2 = [jnp.zeros((20, 15), jnp.float32) for _ in range(2)]
        for kh in range(6):
            rows = v2pad_ref[n, 3 + kh:23 + kh, :]      # one load per tap
            for co in range(2):
                acc2[co] = acc2[co] + rows * w2_ref[co * 6 + (5 - kh)]
        for co in range(2):
            out_ref[n, co, :, :] = jax.nn.sigmoid(acc2[co])


def model_forward(x, w1, w2):
    # x: (1, 1, 16, 16); w1: (1, 2, 4, 4); w2: (1, 2, 6, 1)  [PyTorch layouts]
    # Only wrapper-side prep: pad x by 1 (stage-1 correlation padding) and
    # flatten the weights (contiguous reshape, effectively free).  Kernel
    # flips, stage-2 padding, both convs and both sigmoids all happen inside
    # ONE pallas_call.
    xpad = jnp.pad(x[0, 0], 1)                          # (18, 18)
    return pl.pallas_call(
        fused_model_kernel,
        out_shape=jax.ShapeDtypeStruct((2, 2, 20, 15), jnp.float32),
        in_specs=[
            pl.BlockSpec(memory_space=pltpu.MemorySpace.VMEM),
            pl.BlockSpec(memory_space=pltpu.MemorySpace.SMEM),
            pl.BlockSpec(memory_space=pltpu.MemorySpace.SMEM),
        ],
        out_specs=pl.BlockSpec(memory_space=pltpu.MemorySpace.VMEM),
        scratch_shapes=[pltpu.VMEM((2, 28, 15), jnp.float32)],
    )(xpad, w1.reshape(-1), w2.reshape(-1))


def _conv_transpose2d_ref(x, w, pad):
    # numpy reference: x (N, Cin, H, W), w (Cin, Cout, kH, kW), stride 1
    N, Cin, H, W = x.shape
    _, Cout, kH, kW = w.shape
    out = np.zeros((N, Cout, H + kH - 1, W + kW - 1), np.float32)
    for n in range(N):
        for ci in range(Cin):
            for co in range(Cout):
                for i in range(H):
                    for j in range(W):
                        out[n, co, i:i + kH, j:j + kW] += x[n, ci, i, j] * w[ci, co]
    ph, pw = pad
    return out[:, :, ph:out.shape[2] - ph if ph else None,
                     pw:out.shape[3] - pw if pw else None]


if __name__ == "__main__":
    key = jax.random.PRNGKey(0)
    k1, k2, k3 = jax.random.split(key, 3)
    x = jax.random.normal(k1, (1, 1, 16, 16), jnp.float32)
    # PyTorch ConvTranspose2d weight shape: (in_channels, out_channels, kH, kW)
    w1 = jax.random.normal(k2, (1, 2, 4, 4), jnp.float32) * 0.25
    w2 = jax.random.normal(k3, (1, 2, 6, 1), jnp.float32) * 0.25

    out = jax.jit(model_forward)(x, w1, w2)
    out = jax.block_until_ready(out)

    # numpy reference check
    xn, w1n, w2n = np.asarray(x), np.asarray(w1), np.asarray(w2)
    v1r = _conv_transpose2d_ref(xn, w1n, (2, 2))
    v2r = 1.0 / (1.0 + np.exp(-v1r))                     # (1, 2, 15, 15)
    v2rb = v2r.reshape(2, 1, 15, 15)                     # channel -> batch fold
    v3r = _conv_transpose2d_ref(v2rb, w2n, (0, 0))
    v4r = 1.0 / (1.0 + np.exp(-v3r))                     # (2, 2, 20, 15)

    np.testing.assert_allclose(np.asarray(out), v4r, rtol=1e-5, atol=1e-5)
    print("KERNEL_OK")
</pallas_src>

<mosaic_0001>
module attributes {stable_mosaic.version = 11 : i64} {
  func.func @fused_model_kernel(%arg0: memref<18x18xf32, #tpu.memory_space<vmem>>, %arg1: memref<32xf32, #tpu.memory_space<smem>>, %arg2: memref<12xf32, #tpu.memory_space<smem>>, %arg3: memref<2x2x20x15xf32, #tpu.memory_space<vmem>>, %arg4: memref<2x28x15xf32, #tpu.memory_space<vmem>>) attributes {dimension_semantics = [], scalar_prefetch = 0 : i64, scratch_operands = 1 : i64, tpu.core_type = #tpu.core_type<tc>} {
    %cst = arith.constant 0.000000e+00 : f32
    %0 = vector.broadcast %cst : f32 to vector<2x28x15xf32>
    %c0 = arith.constant 0 : index
    %c0_0 = arith.constant 0 : index
    %c0_1 = arith.constant 0 : index
    %1 = vector.load %arg4[%c0, %c0_0, %c0_1] : memref<2x28x15xf32, #tpu.memory_space<vmem>>, vector<2x28x15xf32>
    tpu.vector_store %arg4[%c0, %c0_0, %c0_1], %0 {strides = array<i32>} : memref<2x28x15xf32, #tpu.memory_space<vmem>>, vector<2x28x15xf32>,
    %cst_2 = arith.constant 0.000000e+00 : f32
    %2 = vector.broadcast %cst_2 : f32 to vector<15x15xf32>
    %cst_3 = arith.constant 0.000000e+00 : f32
    %3 = vector.broadcast %cst_3 : f32 to vector<15x15xf32>
    %c0_4 = arith.constant 0 : index
    %c0_5 = arith.constant 0 : index
    %4 = vector.load %arg0[%c0_4, %c0_5] : memref<18x18xf32, #tpu.memory_space<vmem>>, vector<15x15xf32>
    %c15 = arith.constant 15 : index
    %5 = memref.load %arg1[%c15] : memref<32xf32, #tpu.memory_space<smem>>
    %6 = vector.broadcast %5 : f32 to vector<15x15xf32>
    %7 = arith.mulf %4, %6 : vector<15x15xf32>
    %8 = arith.addf %2, %7 : vector<15x15xf32>
    %c31 = arith.constant 31 : index
    %9 = memref.load %arg1[%c31] : memref<32xf32, #tpu.memory_space<smem>>
    %10 = vector.broadcast %9 : f32 to vector<15x15xf32>
    %11 = arith.mulf %4, %10 : vector<15x15xf32>
    %12 = arith.addf %3, %11 : vector<15x15xf32>
    %c0_6 = arith.constant 0 : index
    %c1 = arith.constant 1 : index
    %13 = vector.load %arg0[%c0_6, %c1] : memref<18x18xf32, #tpu.memory_space<vmem>>, vector<15x15xf32>
    %c14 = arith.constant 14 : index
    %14 = memref.load %arg1[%c14] : memref<32xf32, #tpu.memory_space<smem>>
    %15 = vector.broadcast %14 : f32 to vector<15x15xf32>
    %16 = arith.mulf %13, %15 : vector<15x15xf32>
    %17 = arith.addf %8, %16 : vector<15x15xf32>
    %c30 = arith.constant 30 : index
    %18 = memref.load %arg1[%c30] : memref<32xf32, #tpu.memory_space<smem>>
    %19 = vector.broadcast %18 : f32 to vector<15x15xf32>
    %20 = arith.mulf %13, %19 : vector<15x15xf32>
    %21 = arith.addf %12, %20 : vector<15x15xf32>
    %c0_7 = arith.constant 0 : index
    %c2 = arith.constant 2 : index
    %22 = vector.load %arg0[%c0_7, %c2] : memref<18x18xf32, #tpu.memory_space<vmem>>, vector<15x15xf32>
    %c13 = arith.constant 13 : index
    %23 = memref.load %arg1[%c13] : memref<32xf32, #tpu.memory_space<smem>>
    %24 = vector.broadcast %23 : f32 to vector<15x15xf32>
    %25 = arith.mulf %22, %24 : vector<15x15xf32>
    %26 = arith.addf %17, %25 : vector<15x15xf32>
    %c29 = arith.constant 29 : index
    %27 = memref.load %arg1[%c29] : memref<32xf32, #tpu.memory_space<smem>>
    %28 = vector.broadcast %27 : f32 to vector<15x15xf32>
    %29 = arith.mulf %22, %28 : vector<15x15xf32>
    %30 = arith.addf %21, %29 : vector<15x15xf32>
    %c0_8 = arith.constant 0 : index
    %c3 = arith.constant 3 : index
    %31 = vector.load %arg0[%c0_8, %c3] : memref<18x18xf32, #tpu.memory_space<vmem>>, vector<15x15xf32>
    %c12 = arith.constant 12 : index
    %32 = memref.load %arg1[%c12] : memref<32xf32, #tpu.memory_space<smem>>
    %33 = vector.broadcast %32 : f32 to vector<15x15xf32>
    %34 = arith.mulf %31, %33 : vector<15x15xf32>
    %35 = arith.addf %26, %34 : vector<15x15xf32>
    %c28 = arith.constant 28 : index
    %36 = memref.load %arg1[%c28] : memref<32xf32, #tpu.memory_space<smem>>
    %37 = vector.broadcast %36 : f32 to vector<15x15xf32>
    %38 = arith.mulf %31, %37 : vector<15x15xf32>
    %39 = arith.addf %30, %38 : vector<15x15xf32>
    %c1_9 = arith.constant 1 : index
    %c0_10 = arith.constant 0 : index
    %40 = vector.load %arg0[%c1_9, %c0_10] : memref<18x18xf32, #tpu.memory_space<vmem>>, vector<15x15xf32>
    %c11 = arith.constant 11 : index
    %41 = memref.load %arg1[%c11] : memref<32xf32, #tpu.memory_space<smem>>
    %42 = vector.broadcast %41 : f32 to vector<15x15xf32>
    %43 = arith.mulf %40, %42 : vector<15x15xf32>
    %44 = arith.addf %35, %43 : vector<15x15xf32>
    %c27 = arith.constant 27 : index
    %45 = memref.load %arg1[%c27] : memref<32xf32, #tpu.memory_space<smem>>
    %46 = vector.broadcast %45 : f32 to vector<15x15xf32>
    %47 = arith.mulf %40, %46 : vector<15x15xf32>
    %48 = arith.addf %39, %47 : vector<15x15xf32>
    %c1_11 = arith.constant 1 : index
    %c1_12 = arith.constant 1 : index
    %49 = vector.load %arg0[%c1_11, %c1_12] : memref<18x18xf32, #tpu.memory_space<vmem>>, vector<15x15xf32>
    %c10 = arith.constant 10 : index
    %50 = memref.load %arg1[%c10] : memref<32xf32, #tpu.memory_space<smem>>
    %51 = vector.broadcast %50 : f32 to vector<15x15xf32>
    %52 = arith.mulf %49, %51 : vector<15x15xf32>
    %53 = arith.addf %44, %52 : vector<15x15xf32>
    %c26 = arith.constant 26 : index
    %54 = memref.load %arg1[%c26] : memref<32xf32, #tpu.memory_space<smem>>
    %55 = vector.broadcast %54 : f32 to vector<15x15xf32>
    %56 = arith.mulf %49, %55 : vector<15x15xf32>
    %57 = arith.addf %48, %56 : vector<15x15xf32>
    %c1_13 = arith.constant 1 : index
    %c2_14 = arith.constant 2 : index
    %58 = vector.load %arg0[%c1_13, %c2_14] : memref<18x18xf32, #tpu.memory_space<vmem>>, vector<15x15xf32>
    %c9 = arith.constant 9 : index
    %59 = memref.load %arg1[%c9] : memref<32xf32, #tpu.memory_space<smem>>
    %60 = vector.broadcast %59 : f32 to vector<15x15xf32>
    %61 = arith.mulf %58, %60 : vector<15x15xf32>
    %62 = arith.addf %53, %61 : vector<15x15xf32>
    %c25 = arith.constant 25 : index
    %63 = memref.load %arg1[%c25] : memref<32xf32, #tpu.memory_space<smem>>
    %64 = vector.broadcast %63 : f32 to vector<15x15xf32>
    %65 = arith.mulf %58, %64 : vector<15x15xf32>
    %66 = arith.addf %57, %65 : vector<15x15xf32>
    %c1_15 = arith.constant 1 : index
    %c3_16 = arith.constant 3 : index
    %67 = vector.load %arg0[%c1_15, %c3_16] : memref<18x18xf32, #tpu.memory_space<vmem>>, vector<15x15xf32>
    %c8 = arith.constant 8 : index
    %68 = memref.load %arg1[%c8] : memref<32xf32, #tpu.memory_space<smem>>
    %69 = vector.broadcast %68 : f32 to vector<15x15xf32>
    %70 = arith.mulf %67, %69 : vector<15x15xf32>
    %71 = arith.addf %62, %70 : vector<15x15xf32>
    %c24 = arith.constant 24 : index
    %72 = memref.load %arg1[%c24] : memref<32xf32, #tpu.memory_space<smem>>
    %73 = vector.broadcast %72 : f32 to vector<15x15xf32>
    %74 = arith.mulf %67, %73 : vector<15x15xf32>
    %75 = arith.addf %66, %74 : vector<15x15xf32>
    %c2_17 = arith.constant 2 : index
    %c0_18 = arith.constant 0 : index
    %76 = vector.load %arg0[%c2_17, %c0_18] : memref<18x18xf32, #tpu.memory_space<vmem>>, vector<15x15xf32>
    %c7 = arith.constant 7 : index
    %77 = memref.load %arg1[%c7] : memref<32xf32, #tpu.memory_space<smem>>
    %78 = vector.broadcast %77 : f32 to vector<15x15xf32>
    %79 = arith.mulf %76, %78 : vector<15x15xf32>
    %80 = arith.addf %71, %79 : vector<15x15xf32>
    %c23 = arith.constant 23 : index
    %81 = memref.load %arg1[%c23] : memref<32xf32, #tpu.memory_space<smem>>
    %82 = vector.broadcast %81 : f32 to vector<15x15xf32>
    %83 = arith.mulf %76, %82 : vector<15x15xf32>
    %84 = arith.addf %75, %83 : vector<15x15xf32>
    %c2_19 = arith.constant 2 : index
    %c1_20 = arith.constant 1 : index
    %85 = vector.load %arg0[%c2_19, %c1_20] : memref<18x18xf32, #tpu.memory_space<vmem>>, vector<15x15xf32>
    %c6 = arith.constant 6 : index
    %86 = memref.load %arg1[%c6] : memref<32xf32, #tpu.memory_space<smem>>
    %87 = vector.broadcast %86 : f32 to vector<15x15xf32>
    %88 = arith.mulf %85, %87 : vector<15x15xf32>
    %89 = arith.addf %80, %88 : vector<15x15xf32>
    %c22 = arith.constant 22 : index
    %90 = memref.load %arg1[%c22] : memref<32xf32, #tpu.memory_space<smem>>
    %91 = vector.broadcast %90 : f32 to vector<15x15xf32>
    %92 = arith.mulf %85, %91 : vector<15x15xf32>
    %93 = arith.addf %84, %92 : vector<15x15xf32>
    %c2_21 = arith.constant 2 : index
    %c2_22 = arith.constant 2 : index
    %94 = vector.load %arg0[%c2_21, %c2_22] : memref<18x18xf32, #tpu.memory_space<vmem>>, vector<15x15xf32>
    %c5 = arith.constant 5 : index
    %95 = memref.load %arg1[%c5] : memref<32xf32, #tpu.memory_space<smem>>
    %96 = vector.broadcast %95 : f32 to vector<15x15xf32>
    %97 = arith.mulf %94, %96 : vector<15x15xf32>
    %98 = arith.addf %89, %97 : vector<15x15xf32>
    %c21 = arith.constant 21 : index
    %99 = memref.load %arg1[%c21] : memref<32xf32, #tpu.memory_space<smem>>
    %100 = vector.broadcast %99 : f32 to vector<15x15xf32>
    %101 = arith.mulf %94, %100 : vector<15x15xf32>
    %102 = arith.addf %93, %101 : vector<15x15xf32>
    %c2_23 = arith.constant 2 : index
    %c3_24 = arith.constant 3 : index
    %103 = vector.load %arg0[%c2_23, %c3_24] : memref<18x18xf32, #tpu.memory_space<vmem>>, vector<15x15xf32>
    %c4 = arith.constant 4 : index
    %104 = memref.load %arg1[%c4] : memref<32xf32, #tpu.memory_space<smem>>
    %105 = vector.broadcast %104 : f32 to vector<15x15xf32>
    %106 = arith.mulf %103, %105 : vector<15x15xf32>
    %107 = arith.addf %98, %106 : vector<15x15xf32>
    %c20 = arith.constant 20 : index
    %108 = memref.load %arg1[%c20] : memref<32xf32, #tpu.memory_space<smem>>
    %109 = vector.broadcast %108 : f32 to vector<15x15xf32>
    %110 = arith.mulf %103, %109 : vector<15x15xf32>
    %111 = arith.addf %102, %110 : vector<15x15xf32>
    %c3_25 = arith.constant 3 : index
    %c0_26 = arith.constant 0 : index
    %112 = vector.load %arg0[%c3_25, %c0_26] : memref<18x18xf32, #tpu.memory_space<vmem>>, vector<15x15xf32>
    %c3_27 = arith.constant 3 : index
    %113 = memref.load %arg1[%c3_27] : memref<32xf32, #tpu.memory_space<smem>>
    %114 = vector.broadcast %113 : f32 to vector<15x15xf32>
    %115 = arith.mulf %112, %114 : vector<15x15xf32>
    %116 = arith.addf %107, %115 : vector<15x15xf32>
    %c19 = arith.constant 19 : index
    %117 = memref.load %arg1[%c19] : memref<32xf32, #tpu.memory_space<smem>>
    %118 = vector.broadcast %117 : f32 to vector<15x15xf32>
    %119 = arith.mulf %112, %118 : vector<15x15xf32>
    %120 = arith.addf %111, %119 : vector<15x15xf32>
    %c3_28 = arith.constant 3 : index
    %c1_29 = arith.constant 1 : index
    %121 = vector.load %arg0[%c3_28, %c1_29] : memref<18x18xf32, #tpu.memory_space<vmem>>, vector<15x15xf32>
    %c2_30 = arith.constant 2 : index
    %122 = memref.load %arg1[%c2_30] : memref<32xf32, #tpu.memory_space<smem>>
    %123 = vector.broadcast %122 : f32 to vector<15x15xf32>
    %124 = arith.mulf %121, %123 : vector<15x15xf32>
    %125 = arith.addf %116, %124 : vector<15x15xf32>
    %c18 = arith.constant 18 : index
    %126 = memref.load %arg1[%c18] : memref<32xf32, #tpu.memory_space<smem>>
    %127 = vector.broadcast %126 : f32 to vector<15x15xf32>
    %128 = arith.mulf %121, %127 : vector<15x15xf32>
    %129 = arith.addf %120, %128 : vector<15x15xf32>
    %c3_31 = arith.constant 3 : index
    %c2_32 = arith.constant 2 : index
    %130 = vector.load %arg0[%c3_31, %c2_32] : memref<18x18xf32, #tpu.memory_space<vmem>>, vector<15x15xf32>
    %c1_33 = arith.constant 1 : index
    %131 = memref.load %arg1[%c1_33] : memref<32xf32, #tpu.memory_space<smem>>
    %132 = vector.broadcast %131 : f32 to vector<15x15xf32>
    %133 = arith.mulf %130, %132 : vector<15x15xf32>
    %134 = arith.addf %125, %133 : vector<15x15xf32>
    %c17 = arith.constant 17 : index
    %135 = memref.load %arg1[%c17] : memref<32xf32, #tpu.memory_space<smem>>
    %136 = vector.broadcast %135 : f32 to vector<15x15xf32>
    %137 = arith.mulf %130, %136 : vector<15x15xf32>
    %138 = arith.addf %129, %137 : vector<15x15xf32>
    %c3_34 = arith.constant 3 : index
    %c3_35 = arith.constant 3 : index
    %139 = vector.load %arg0[%c3_34, %c3_35] : memref<18x18xf32, #tpu.memory_space<vmem>>, vector<15x15xf32>
    %c0_36 = arith.constant 0 : index
    %140 = memref.load %arg1[%c0_36] : memref<32xf32, #tpu.memory_space<smem>>
    %141 = vector.broadcast %140 : f32 to vector<15x15xf32>
    %142 = arith.mulf %139, %141 : vector<15x15xf32>
    %143 = arith.addf %134, %142 : vector<15x15xf32>
    %c16 = arith.constant 16 : index
    %144 = memref.load %arg1[%c16] : memref<32xf32, #tpu.memory_space<smem>>
    %145 = vector.broadcast %144 : f32 to vector<15x15xf32>
    %146 = arith.mulf %139, %145 : vector<15x15xf32>
    %147 = arith.addf %138, %146 : vector<15x15xf32>
    %148 = arith.negf %143 : vector<15x15xf32>
    %149 = math.exp %148 : vector<15x15xf32>
    %cst_37 = arith.constant 1.000000e+00 : f32
    %150 = vector.broadcast %cst_37 : f32 to vector<15x15xf32>
    %151 = arith.addf %150, %149 : vector<15x15xf32>
    %152 = arith.divf %150, %151 : vector<15x15xf32>
    %c0_38 = arith.constant 0 : index
    %c8_39 = arith.constant 8 : index
    %c0_40 = arith.constant 0 : index
    %153 = vector.load %arg4[%c0_38, %c8_39, %c0_40] : memref<2x28x15xf32, #tpu.memory_space<vmem>>, vector<1x15x15xf32>
    %154 = vector.shape_cast %153 : vector<1x15x15xf32> to vector<15x15xf32>
    %155 = vector.shape_cast %152 : vector<15x15xf32> to vector<1x15x15xf32>
    tpu.vector_store %arg4[%c0_38, %c8_39, %c0_40], %155 {strides = array<i32>} : memref<2x28x15xf32, #tpu.memory_space<vmem>>, vector<1x15x15xf32>,
    %156 = arith.negf %147 : vector<15x15xf32>
    %157 = math.exp %156 : vector<15x15xf32>
    %cst_41 = arith.constant 1.000000e+00 : f32
    %158 = vector.broadcast %cst_41 : f32 to vector<15x15xf32>
    %159 = arith.addf %158, %157 : vector<15x15xf32>
    %160 = arith.divf %158, %159 : vector<15x15xf32>
    %c1_42 = arith.constant 1 : index
    %c8_43 = arith.constant 8 : index
    %c0_44 = arith.constant 0 : index
    %161 = vector.load %arg4[%c1_42, %c8_43, %c0_44] : memref<2x28x15xf32, #tpu.memory_space<vmem>>, vector<1x15x15xf32>
    %162 = vector.shape_cast %161 : vector<1x15x15xf32> to vector<15x15xf32>
    %163 = vector.shape_cast %160 : vector<15x15xf32> to vector<1x15x15xf32>
    tpu.vector_store %arg4[%c1_42, %c8_43, %c0_44], %163 {strides = array<i32>} : memref<2x28x15xf32, #tpu.memory_space<vmem>>, vector<1x15x15xf32>,
    %cst_45 = arith.constant 0.000000e+00 : f32
    %164 = vector.broadcast %cst_45 : f32 to vector<20x15xf32>
    %cst_46 = arith.constant 0.000000e+00 : f32
    %165 = vector.broadcast %cst_46 : f32 to vector<20x15xf32>
    %c0_47 = arith.constant 0 : index
    %c3_48 = arith.constant 3 : index
    %c0_49 = arith.constant 0 : index
    %166 = vector.load %arg4[%c0_47, %c3_48, %c0_49] : memref<2x28x15xf32, #tpu.memory_space<vmem>>, vector<1x20x15xf32>
    %167 = vector.shape_cast %166 : vector<1x20x15xf32> to vector<20x15xf32>
    %c5_50 = arith.constant 5 : index
    %168 = memref.load %arg2[%c5_50] : memref<12xf32, #tpu.memory_space<smem>>
    %169 = vector.broadcast %168 : f32 to vector<20x15xf32>
    %170 = arith.mulf %167, %169 : vector<20x15xf32>
    %171 = arith.addf %164, %170 : vector<20x15xf32>
    %c11_51 = arith.constant 11 : index
    %172 = memref.load %arg2[%c11_51] : memref<12xf32, #tpu.memory_space<smem>>
    %173 = vector.broadcast %172 : f32 to vector<20x15xf32>
    %174 = arith.mulf %167, %173 : vector<20x15xf32>
    %175 = arith.addf %165, %174 : vector<20x15xf32>
    %c0_52 = arith.constant 0 : index
    %c4_53 = arith.constant 4 : index
    %c0_54 = arith.constant 0 : index
    %176 = vector.load %arg4[%c0_52, %c4_53, %c0_54] : memref<2x28x15xf32, #tpu.memory_space<vmem>>, vector<1x20x15xf32>
    %177 = vector.shape_cast %176 : vector<1x20x15xf32> to vector<20x15xf32>
    %c4_55 = arith.constant 4 : index
    %178 = memref.load %arg2[%c4_55] : memref<12xf32, #tpu.memory_space<smem>>
    %179 = vector.broadcast %178 : f32 to vector<20x15xf32>
    %180 = arith.mulf %177, %179 : vector<20x15xf32>
    %181 = arith.addf %171, %180 : vector<20x15xf32>
    %c10_56 = arith.constant 10 : index
    %182 = memref.load %arg2[%c10_56] : memref<12xf32, #tpu.memory_space<smem>>
    %183 = vector.broadcast %182 : f32 to vector<20x15xf32>
    %184 = arith.mulf %177, %183 : vector<20x15xf32>
    %185 = arith.addf %175, %184 : vector<20x15xf32>
    %c0_57 = arith.constant 0 : index
    %c5_58 = arith.constant 5 : index
    %c0_59 = arith.constant 0 : index
    %186 = vector.load %arg4[%c0_57, %c5_58, %c0_59] : memref<2x28x15xf32, #tpu.memory_space<vmem>>, vector<1x20x15xf32>
    %187 = vector.shape_cast %186 : vector<1x20x15xf32> to vector<20x15xf32>
    %c3_60 = arith.constant 3 : index
    %188 = memref.load %arg2[%c3_60] : memref<12xf32, #tpu.memory_space<smem>>
    %189 = vector.broadcast %188 : f32 to vector<20x15xf32>
    %190 = arith.mulf %187, %189 : vector<20x15xf32>
    %191 = arith.addf %181, %190 : vector<20x15xf32>
    %c9_61 = arith.constant 9 : index
    %192 = memref.load %arg2[%c9_61] : memref<12xf32, #tpu.memory_space<smem>>
    %193 = vector.broadcast %192 : f32 to vector<20x15xf32>
    %194 = arith.mulf %187, %193 : vector<20x15xf32>
    %195 = arith.addf %185, %194 : vector<20x15xf32>
    %c0_62 = arith.constant 0 : index
    %c6_63 = arith.constant 6 : index
    %c0_64 = arith.constant 0 : index
    %196 = vector.load %arg4[%c0_62, %c6_63, %c0_64] : memref<2x28x15xf32, #tpu.memory_space<vmem>>, vector<1x20x15xf32>
    %197 = vector.shape_cast %196 : vector<1x20x15xf32> to vector<20x15xf32>
    %c2_65 = arith.constant 2 : index
    %198 = memref.load %arg2[%c2_65] : memref<12xf32, #tpu.memory_space<smem>>
    %199 = vector.broadcast %198 : f32 to vector<20x15xf32>
    %200 = arith.mulf %197, %199 : vector<20x15xf32>
    %201 = arith.addf %191, %200 : vector<20x15xf32>
    %c8_66 = arith.constant 8 : index
    %202 = memref.load %arg2[%c8_66] : memref<12xf32, #tpu.memory_space<smem>>
    %203 = vector.broadcast %202 : f32 to vector<20x15xf32>
    %204 = arith.mulf %197, %203 : vector<20x15xf32>
    %205 = arith.addf %195, %204 : vector<20x15xf32>
    %c0_67 = arith.constant 0 : index
    %c7_68 = arith.constant 7 : index
    %c0_69 = arith.constant 0 : index
    %206 = vector.load %arg4[%c0_67, %c7_68, %c0_69] : memref<2x28x15xf32, #tpu.memory_space<vmem>>, vector<1x20x15xf32>
    %207 = vector.shape_cast %206 : vector<1x20x15xf32> to vector<20x15xf32>
    %c1_70 = arith.constant 1 : index
    %208 = memref.load %arg2[%c1_70] : memref<12xf32, #tpu.memory_space<smem>>
    %209 = vector.broadcast %208 : f32 to vector<20x15xf32>
    %210 = arith.mulf %207, %209 : vector<20x15xf32>
    %211 = arith.addf %201, %210 : vector<20x15xf32>
    %c7_71 = arith.constant 7 : index
    %212 = memref.load %arg2[%c7_71] : memref<12xf32, #tpu.memory_space<smem>>
    %213 = vector.broadcast %212 : f32 to vector<20x15xf32>
    %214 = arith.mulf %207, %213 : vector<20x15xf32>
    %215 = arith.addf %205, %214 : vector<20x15xf32>
    %c0_72 = arith.constant 0 : index
    %c8_73 = arith.constant 8 : index
    %c0_74 = arith.constant 0 : index
    %216 = vector.load %arg4[%c0_72, %c8_73, %c0_74] : memref<2x28x15xf32, #tpu.memory_space<vmem>>, vector<1x20x15xf32>
    %217 = vector.shape_cast %216 : vector<1x20x15xf32> to vector<20x15xf32>
    %c0_75 = arith.constant 0 : index
    %218 = memref.load %arg2[%c0_75] : memref<12xf32, #tpu.memory_space<smem>>
    %219 = vector.broadcast %218 : f32 to vector<20x15xf32>
    %220 = arith.mulf %217, %219 : vector<20x15xf32>
    %221 = arith.addf %211, %220 : vector<20x15xf32>
    %c6_76 = arith.constant 6 : index
    %222 = memref.load %arg2[%c6_76] : memref<12xf32, #tpu.memory_space<smem>>
    %223 = vector.broadcast %222 : f32 to vector<20x15xf32>
    %224 = arith.mulf %217, %223 : vector<20x15xf32>
    %225 = arith.addf %215, %224 : vector<20x15xf32>
    %226 = arith.negf %221 : vector<20x15xf32>
    %227 = math.exp %226 : vector<20x15xf32>
    %cst_77 = arith.constant 1.000000e+00 : f32
    %228 = vector.broadcast %cst_77 : f32 to vector<20x15xf32>
    %229 = arith.addf %228, %227 : vector<20x15xf32>
    %230 = arith.divf %228, %229 : vector<20x15xf32>
    %c0_78 = arith.constant 0 : index
    %c0_79 = arith.constant 0 : index
    %c0_80 = arith.constant 0 : index
    %c0_81 = arith.constant 0 : index
    %231 = vector.load %arg3[%c0_78, %c0_79, %c0_80, %c0_81] : memref<2x2x20x15xf32, #tpu.memory_space<vmem>>, vector<1x1x20x15xf32>
    %232 = vector.shape_cast %231 : vector<1x1x20x15xf32> to vector<20x15xf32>
    %233 = vector.shape_cast %230 : vector<20x15xf32> to vector<1x1x20x15xf32>
    tpu.vector_store %arg3[%c0_78, %c0_79, %c0_80, %c0_81], %233 {strides = array<i32>} : memref<2x2x20x15xf32, #tpu.memory_space<vmem>>, vector<1x1x20x15xf32>,
    %234 = arith.negf %225 : vector<20x15xf32>
    %235 = math.exp %234 : vector<20x15xf32>
    %cst_82 = arith.constant 1.000000e+00 : f32
    %236 = vector.broadcast %cst_82 : f32 to vector<20x15xf32>
    %237 = arith.addf %236, %235 : vector<20x15xf32>
    %238 = arith.divf %236, %237 : vector<20x15xf32>
    %c0_83 = arith.constant 0 : index
    %c1_84 = arith.constant 1 : index
    %c0_85 = arith.constant 0 : index
    %c0_86 = arith.constant 0 : index
    %239 = vector.load %arg3[%c0_83, %c1_84, %c0_85, %c0_86] : memref<2x2x20x15xf32, #tpu.memory_space<vmem>>, vector<1x1x20x15xf32>
    %240 = vector.shape_cast %239 : vector<1x1x20x15xf32> to vector<20x15xf32>
    %241 = vector.shape_cast %238 : vector<20x15xf32> to vector<1x1x20x15xf32>
    tpu.vector_store %arg3[%c0_83, %c1_84, %c0_85, %c0_86], %241 {strides = array<i32>} : memref<2x2x20x15xf32, #tpu.memory_space<vmem>>, vector<1x1x20x15xf32>,
    %cst_87 = arith.constant 0.000000e+00 : f32
    %242 = vector.broadcast %cst_87 : f32 to vector<20x15xf32>
    %cst_88 = arith.constant 0.000000e+00 : f32
    %243 = vector.broadcast %cst_88 : f32 to vector<20x15xf32>
    %c1_89 = arith.constant 1 : index
    %c3_90 = arith.constant 3 : index
    %c0_91 = arith.constant 0 : index
    %244 = vector.load %arg4[%c1_89, %c3_90, %c0_91] : memref<2x28x15xf32, #tpu.memory_space<vmem>>, vector<1x20x15xf32>
    %245 = vector.shape_cast %244 : vector<1x20x15xf32> to vector<20x15xf32>
    %c5_92 = arith.constant 5 : index
    %246 = memref.load %arg2[%c5_92] : memref<12xf32, #tpu.memory_space<smem>>
    %247 = vector.broadcast %246 : f32 to vector<20x15xf32>
    %248 = arith.mulf %245, %247 : vector<20x15xf32>
    %249 = arith.addf %242, %248 : vector<20x15xf32>
    %c11_93 = arith.constant 11 : index
    %250 = memref.load %arg2[%c11_93] : memref<12xf32, #tpu.memory_space<smem>>
    %251 = vector.broadcast %250 : f32 to vector<20x15xf32>
    %252 = arith.mulf %245, %251 : vector<20x15xf32>
    %253 = arith.addf %243, %252 : vector<20x15xf32>
    %c1_94 = arith.constant 1 : index
    %c4_95 = arith.constant 4 : index
    %c0_96 = arith.constant 0 : index
    %254 = vector.load %arg4[%c1_94, %c4_95, %c0_96] : memref<2x28x15xf32, #tpu.memory_space<vmem>>, vector<1x20x15xf32>
    %255 = vector.shape_cast %254 : vector<1x20x15xf32> to vector<20x15xf32>
    %c4_97 = arith.constant 4 : index
    %256 = memref.load %arg2[%c4_97] : memref<12xf32, #tpu.memory_space<smem>>
    %257 = vector.broadcast %256 : f32 to vector<20x15xf32>
    %258 = arith.mulf %255, %257 : vector<20x15xf32>
    %259 = arith.addf %249, %258 : vector<20x15xf32>
    %c10_98 = arith.constant 10 : index
    %260 = memref.load %arg2[%c10_98] : memref<12xf32, #tpu.memory_space<smem>>
    %261 = vector.broadcast %260 : f32 to vector<20x15xf32>
    %262 = arith.mulf %255, %261 : vector<20x15xf32>
    %263 = arith.addf %253, %262 : vector<20x15xf32>
    %c1_99 = arith.constant 1 : index
    %c5_100 = arith.constant 5 : index
    %c0_101 = arith.constant 0 : index
    %264 = vector.load %arg4[%c1_99, %c5_100, %c0_101] : memref<2x28x15xf32, #tpu.memory_space<vmem>>, vector<1x20x15xf32>
    %265 = vector.shape_cast %264 : vector<1x20x15xf32> to vector<20x15xf32>
    %c3_102 = arith.constant 3 : index
    %266 = memref.load %arg2[%c3_102] : memref<12xf32, #tpu.memory_space<smem>>
    %267 = vector.broadcast %266 : f32 to vector<20x15xf32>
    %268 = arith.mulf %265, %267 : vector<20x15xf32>
    %269 = arith.addf %259, %268 : vector<20x15xf32>
    %c9_103 = arith.constant 9 : index
    %270 = memref.load %arg2[%c9_103] : memref<12xf32, #tpu.memory_space<smem>>
    %271 = vector.broadcast %270 : f32 to vector<20x15xf32>
    %272 = arith.mulf %265, %271 : vector<20x15xf32>
    %273 = arith.addf %263, %272 : vector<20x15xf32>
    %c1_104 = arith.constant 1 : index
    %c6_105 = arith.constant 6 : index
    %c0_106 = arith.constant 0 : index
    %274 = vector.load %arg4[%c1_104, %c6_105, %c0_106] : memref<2x28x15xf32, #tpu.memory_space<vmem>>, vector<1x20x15xf32>
    %275 = vector.shape_cast %274 : vector<1x20x15xf32> to vector<20x15xf32>
    %c2_107 = arith.constant 2 : index
    %276 = memref.load %arg2[%c2_107] : memref<12xf32, #tpu.memory_space<smem>>
    %277 = vector.broadcast %276 : f32 to vector<20x15xf32>
    %278 = arith.mulf %275, %277 : vector<20x15xf32>
    %279 = arith.addf %269, %278 : vector<20x15xf32>
    %c8_108 = arith.constant 8 : index
    %280 = memref.load %arg2[%c8_108] : memref<12xf32, #tpu.memory_space<smem>>
    %281 = vector.broadcast %280 : f32 to vector<20x15xf32>
    %282 = arith.mulf %275, %281 : vector<20x15xf32>
    %283 = arith.addf %273, %282 : vector<20x15xf32>
    %c1_109 = arith.constant 1 : index
    %c7_110 = arith.constant 7 : index
    %c0_111 = arith.constant 0 : index
    %284 = vector.load %arg4[%c1_109, %c7_110, %c0_111] : memref<2x28x15xf32, #tpu.memory_space<vmem>>, vector<1x20x15xf32>
    %285 = vector.shape_cast %284 : vector<1x20x15xf32> to vector<20x15xf32>
    %c1_112 = arith.constant 1 : index
    %286 = memref.load %arg2[%c1_112] : memref<12xf32, #tpu.memory_space<smem>>
    %287 = vector.broadcast %286 : f32 to vector<20x15xf32>
    %288 = arith.mulf %285, %287 : vector<20x15xf32>
    %289 = arith.addf %279, %288 : vector<20x15xf32>
    %c7_113 = arith.constant 7 : index
    %290 = memref.load %arg2[%c7_113] : memref<12xf32, #tpu.memory_space<smem>>
    %291 = vector.broadcast %290 : f32 to vector<20x15xf32>
    %292 = arith.mulf %285, %291 : vector<20x15xf32>
    %293 = arith.addf %283, %292 : vector<20x15xf32>
    %c1_114 = arith.constant 1 : index
    %c8_115 = arith.constant 8 : index
    %c0_116 = arith.constant 0 : index
    %294 = vector.load %arg4[%c1_114, %c8_115, %c0_116] : memref<2x28x15xf32, #tpu.memory_space<vmem>>, vector<1x20x15xf32>
    %295 = vector.shape_cast %294 : vector<1x20x15xf32> to vector<20x15xf32>
    %c0_117 = arith.constant 0 : index
    %296 = memref.load %arg2[%c0_117] : memref<12xf32, #tpu.memory_space<smem>>
    %297 = vector.broadcast %296 : f32 to vector<20x15xf32>
    %298 = arith.mulf %295, %297 : vector<20x15xf32>
    %299 = arith.addf %289, %298 : vector<20x15xf32>
    %c6_118 = arith.constant 6 : index
    %300 = memref.load %arg2[%c6_118] : memref<12xf32, #tpu.memory_space<smem>>
    %301 = vector.broadcast %300 : f32 to vector<20x15xf32>
    %302 = arith.mulf %295, %301 : vector<20x15xf32>
    %303 = arith.addf %293, %302 : vector<20x15xf32>
    %304 = arith.negf %299 : vector<20x15xf32>
    %305 = math.exp %304 : vector<20x15xf32>
    %cst_119 = arith.constant 1.000000e+00 : f32
    %306 = vector.broadcast %cst_119 : f32 to vector<20x15xf32>
    %307 = arith.addf %306, %305 : vector<20x15xf32>
    %308 = arith.divf %306, %307 : vector<20x15xf32>
    %c1_120 = arith.constant 1 : index
    %c0_121 = arith.constant 0 : index
    %c0_122 = arith.constant 0 : index
    %c0_123 = arith.constant 0 : index
    %309 = vector.load %arg3[%c1_120, %c0_121, %c0_122, %c0_123] : memref<2x2x20x15xf32, #tpu.memory_space<vmem>>, vector<1x1x20x15xf32>
    %310 = vector.shape_cast %309 : vector<1x1x20x15xf32> to vector<20x15xf32>
    %311 = vector.shape_cast %308 : vector<20x15xf32> to vector<1x1x20x15xf32>
    tpu.vector_store %arg3[%c1_120, %c0_121, %c0_122, %c0_123], %311 {strides = array<i32>} : memref<2x2x20x15xf32, #tpu.memory_space<vmem>>, vector<1x1x20x15xf32>,
    %312 = arith.negf %303 : vector<20x15xf32>
    %313 = math.exp %312 : vector<20x15xf32>
    %cst_124 = arith.constant 1.000000e+00 : f32
    %314 = vector.broadcast %cst_124 : f32 to vector<20x15xf32>
    %315 = arith.addf %314, %313 : vector<20x15xf32>
    %316 = arith.divf %314, %315 : vector<20x15xf32>
    %c1_125 = arith.constant 1 : index
    %c1_126 = arith.constant 1 : index
    %c0_127 = arith.constant 0 : index
    %c0_128 = arith.constant 0 : index
    %317 = vector.load %arg3[%c1_125, %c1_126, %c0_127, %c0_128] : memref<2x2x20x15xf32, #tpu.memory_space<vmem>>, vector<1x1x20x15xf32>
    %318 = vector.shape_cast %317 : vector<1x1x20x15xf32> to vector<20x15xf32>
    %319 = vector.shape_cast %316 : vector<20x15xf32> to vector<1x1x20x15xf32>
    tpu.vector_store %arg3[%c1_125, %c1_126, %c0_127, %c0_128], %319 {strides = array<i32>} : memref<2x2x20x15xf32, #tpu.memory_space<vmem>>, vector<1x1x20x15xf32>,
    return
  }
}

</mosaic_0001>

<llo_original>
// kernel: model_forward.1
$region0: #{model_forward.1}
  #allocation0 [shape = 'u32[]', space=smem, size = 0x4, offset = 0x4, fixed_abs, tag = 'smem constant byte address 0x4 - core index']
  #allocation1 [shape = 'u32[144,128]{1,0:T(1,128)}', space=vmem, size = 0x12000, scoped, tag = 'internal scratch']
  #allocation2 [shape = 'f32[2,28,15]{2,1,0:T(8,128)}', space=vmem, size = 0x8000, scoped, tag = 'scratch operand']
  %s0 = inlined_call_operand.vmem [shape: f32[18,18], index: 0, kind: input, shape index: {}]
  %s1 = inlined_call_operand.vmem [shape: f32[32], index: 1, kind: input, shape index: {}]
  %s2 = inlined_call_operand.vmem [shape: f32[12], index: 2, kind: input, shape index: {}]
  %s3 = inlined_call_operand.vmem [shape: f32[2,2,20,15], index: 3, kind: output, shape index: {}]
  %s4 = sld [smem:[#allocation0]]
  $region30: #{model_forward.1} parent=0
    _
  %s6 = ssub.s32 1, %s4
  %s7 = scalar_select 0, %s6, %s4
  $region1: #{model_forward.1} parent=0
    #allocation3 [shape = 'u8[512]{0}', space=smem, size = 0x200, scoped, tag = 'input window, operand 1, single buffered']
    #allocation4 [shape = 's32[1]{0}', space=sflag, size = 0x4, scoped, tag = 'scoped memory for model_forward.1']
    #allocation5 [shape = 'u8[512]{0}', space=smem, size = 0x200, scoped, tag = 'input window, operand 2, single buffered']
    #allocation6 [shape = 's32[1]{0}', space=sflag, size = 0x4, scoped, tag = 'scoped memory for model_forward.1']
    %8 = vsyncpa [#allocation4], 0
    %9 = vsyncpa [#allocation6], 0
    // Predicated region
    $region2: #{model_forward.1} parent=1 // pred_check
      _
    $region3: #{model_forward.1} parent=1 // pred_check_branch
      %11 = sbr.rel (0) target = $region5
    $region4: #{model_forward.1} parent=1 // pred_region
      _
    $region5: #{model_forward.1} parent=1 // pred_fallthru
      _
    // Predicated region
    $region6: #{model_forward.1} parent=1 // pred_check
      _
    $region7: #{model_forward.1} parent=1 // pred_check_branch
      %13 = sbr.rel (0) target = $region9
    $region8: #{model_forward.1} parent=1 // pred_region
      %s15 = ssub.s32 16, 16
      %16 = vsyncadd [#allocation4], %s15
      %s18 = sshll.u32 %s1, 4
      %s19 = int_to_ptr.vmem [resolvable:$true] %s18
      %21 = dma.vmem_to_smem %s19, 16, [#allocation3], [#allocation4]
    $region9: #{model_forward.1} parent=1 // pred_fallthru
      _
    // Predicated region
    $region10: #{model_forward.1} parent=1 // pred_check
      _
    $region11: #{model_forward.1} parent=1 // pred_check_branch
      %23 = sbr.rel (0) target = $region13
    $region12: #{model_forward.1} parent=1 // pred_region
      %s25 = ssub.s32 16, 16
      %26 = vsyncadd [#allocation6], %s25
      %s28 = sshll.u32 %s2, 4
      %s29 = int_to_ptr.vmem [resolvable:$true] %s28
      %31 = dma.vmem_to_smem %s29, 16, [#allocation5], [#allocation6]
    $region13: #{model_forward.1} parent=1 // pred_fallthru
      _
    // Predicated region
    $region14: #{model_forward.1} parent=1 // pred_check
      _
    $region15: #{model_forward.1} parent=1 // pred_check_branch
      %33 = sbr.rel (0) target = $region17
    $region16: #{model_forward.1} parent=1 // pred_region
      %34 = dma.done [#allocation4], 16
    $region17: #{model_forward.1} parent=1 // pred_fallthru
      _
    // Predicated region
    $region18: #{model_forward.1} parent=1 // pred_check
      _
    $region19: #{model_forward.1} parent=1 // pred_check_branch
      %36 = sbr.rel (0) target = $region21
    $region20: #{model_forward.1} parent=1 // pred_region
      %37 = dma.done [#allocation6], 16
    $region21: #{model_forward.1} parent=1 // pred_fallthru
      _
    %38 = sfence
    %vm39 = vcmask 121856
    %40 = vst.msk [vmem:[#allocation2] sm:$0xff] %vm39, 0.0
    %41 = vst.msk [vmem:[#allocation2 + $0x8] sm:$0xff] %vm39, 0.0
    %42 = vst.msk [vmem:[#allocation2 + $0x10] sm:$0xff] %vm39, 0.0
    %vm43 = vcmask 117760
    %44 = vst.msk [vmem:[#allocation2 + $0x18] sm:$0xf] %vm43, 0.0
    %45 = vst.msk [vmem:[#allocation2 + $0x20] sm:$0xff] %vm39, 0.0
    %46 = vst.msk [vmem:[#allocation2 + $0x28] sm:$0xff] %vm39, 0.0
    %47 = vst.msk [vmem:[#allocation2 + $0x30] sm:$0xff] %vm39, 0.0
    %48 = vst.msk [vmem:[#allocation2 + $0x38] sm:$0xf] %vm43, 0.0
    %v49 = vld [vmem:[%s0] sm:$0xff]
    %v50 = vld [vmem:[%s0 + $0x8] sm:$0x7f]
    %s51 = sld [smem:[#allocation3 + $0xf]]
    %v52 = vstv %s51
    %v53 = vmul.f32 %v49, %v52
    %v54 = vmul.f32 %v50, %v52
    %v55 = vadd.f32 %v53, 0.0
    %v56 = vadd.f32 %v54, 0.0
    %s57 = sld [smem:[#allocation3 + $0x1f]]
    %v58 = vstv %s57
    %v59 = vmul.f32 %v49, %v58
    %v60 = vmul.f32 %v50, %v58
    %v61 = vadd.f32 %v59, 0.0
    %v62 = vadd.f32 %v60, 0.0
    %s63 = sld [smem:[#allocation3 + $0xe]]
    %v64 = vstv %s63
    %v65 = vmul.f32 %v49, %v64
    %v66 = vmul.f32 %v50, %v64
    %69 = vrot.lane.b32.xlu0 %v65, 127
    %v70 = vpop.permute.xlu0 %69
    %71 = vrot.lane.b32.xlu0 %v66, 127
    %v72 = vpop.permute.xlu0 %71
    %v75 = vadd.f32 %v55, %v70
    %v76 = vadd.f32 %v56, %v72
    %s77 = sld [smem:[#allocation3 + $0x1e]]
    %v78 = vstv %s77
    %v79 = vmul.f32 %v49, %v78
    %v80 = vmul.f32 %v50, %v78
    %83 = vrot.lane.b32.xlu0 %v79, 127
    %v84 = vpop.permute.xlu0 %83
    %85 = vrot.lane.b32.xlu0 %v80, 127
    %v86 = vpop.permute.xlu0 %85
    %v89 = vadd.f32 %v61, %v84
    %v90 = vadd.f32 %v62, %v86
    %s91 = sld [smem:[#allocation3 + $0xd]]
    %v92 = vstv %s91
    %v93 = vmul.f32 %v49, %v92
    %v94 = vmul.f32 %v50, %v92
    %97 = vrot.lane.b32.xlu0 %v93, 126
    %v98 = vpop.permute.xlu0 %97
    %99 = vrot.lane.b32.xlu0 %v94, 126
    %v100 = vpop.permute.xlu0 %99
    %v103 = vadd.f32 %v75, %v98
    %v104 = vadd.f32 %v76, %v100
    %s105 = sld [smem:[#allocation3 + $0x1d]]
    %v106 = vstv %s105
    %v107 = vmul.f32 %v49, %v106
    %v108 = vmul.f32 %v50, %v106
    %111 = vrot.lane.b32.xlu0 %v107, 126
    %v112 = vpop.permute.xlu0 %111
    %113 = vrot.lane.b32.xlu0 %v108, 126
    %v114 = vpop.permute.xlu0 %113
    %v117 = vadd.f32 %v89, %v112
    %v118 = vadd.f32 %v90, %v114
    %s119 = sld [smem:[#allocation3 + $0xc]]
    %v120 = vstv %s119
    %v121 = vmul.f32 %v49, %v120
    %v122 = vmul.f32 %v50, %v120
    %125 = vrot.lane.b32.xlu0 %v121, 125
    %v126 = vpop.permute.xlu0 %125
    %127 = vrot.lane.b32.xlu0 %v122, 125
    %v128 = vpop.permute.xlu0 %127
    %v131 = vadd.f32 %v103, %v126
    %v132 = vadd.f32 %v104, %v128
    %s133 = sld [smem:[#allocation3 + $0x1c]]
    %v134 = vstv %s133
    %v135 = vmul.f32 %v49, %v134
    %v136 = vmul.f32 %v50, %v134
    %139 = vrot.lane.b32.xlu0 %v135, 125
    %v140 = vpop.permute.xlu0 %139
    %141 = vrot.lane.b32.xlu0 %v136, 125
    %v142 = vpop.permute.xlu0 %141
    %v145 = vadd.f32 %v117, %v140
    %v146 = vadd.f32 %v118, %v142
    %v147 = vld [vmem:[%s0 + $0x1] sm:$0xff]
    %v148 = vld [vmem:[%s0 + $0x9] sm:$0x7f]
    %s149 = sld [smem:[#allocation3 + $0xb]]
    %v150 = vstv %s149
    %v151 = vmul.f32 %v147, %v150
    %v152 = vmul.f32 %v148, %v150
    %v153 = vadd.f32 %v131, %v151
    %v154 = vadd.f32 %v132, %v152
    %s155 = sld [smem:[#allocation3 + $0x1b]]
    %v156 = vstv %s155
    %v157 = vmul.f32 %v147, %v156
    %v158 = vmul.f32 %v148, %v156
    %v159 = vadd.f32 %v145, %v157
    %v160 = vadd.f32 %v146, %v158
    %s161 = sld [smem:[#allocation3 + $0xa]]
    %v162 = vstv %s161
    %v163 = vmul.f32 %v147, %v162
    %v164 = vmul.f32 %v148, %v162
    %167 = vrot.lane.b32.xlu0 %v163, 127
    %v168 = vpop.permute.xlu0 %167
    %169 = vrot.lane.b32.xlu0 %v164, 127
    %v170 = vpop.permute.xlu0 %169
    %v173 = vadd.f32 %v153, %v168
    %v174 = vadd.f32 %v154, %v170
    %s175 = sld [smem:[#allocation3 + $0x1a]]
    %v176 = vstv %s175
    %v177 = vmul.f32 %v147, %v176
    %v178 = vmul.f32 %v148, %v176
    %181 = vrot.lane.b32.xlu0 %v177, 127
    %v182 = vpop.permute.xlu0 %181
    %183 = vrot.lane.b32.xlu0 %v178, 127
    %v184 = vpop.permute.xlu0 %183
    %v187 = vadd.f32 %v159, %v182
    %v188 = vadd.f32 %v160, %v184
    %s189 = sld [smem:[#allocation3 + $0x9]]
    %v190 = vstv %s189
    %v191 = vmul.f32 %v147, %v190
    %v192 = vmul.f32 %v148, %v190
    %195 = vrot.lane.b32.xlu0 %v191, 126
    %v196 = vpop.permute.xlu0 %195
    %197 = vrot.lane.b32.xlu0 %v192, 126
    %v198 = vpop.permute.xlu0 %197
    %v201 = vadd.f32 %v173, %v196
    %v202 = vadd.f32 %v174, %v198
    %s203 = sld [smem:[#allocation3 + $0x19]]
    %v204 = vstv %s203
    %v205 = vmul.f32 %v147, %v204
    %v206 = vmul.f32 %v148, %v204
    %209 = vrot.lane.b32.xlu0 %v205, 126
    %v210 = vpop.permute.xlu0 %209
    %211 = vrot.lane.b32.xlu0 %v206, 126
    %v212 = vpop.permute.xlu0 %211
    %v215 = vadd.f32 %v187, %v210
    %v216 = vadd.f32 %v188, %v212
    %s217 = sld [smem:[#allocation3 + $0x8]]
    %v218 = vstv %s217
    %v219 = vmul.f32 %v147, %v218
    %v220 = vmul.f32 %v148, %v218
    %223 = vrot.lane.b32.xlu0 %v219, 125
    %v224 = vpop.permute.xlu0 %223
    %225 = vrot.lane.b32.xlu0 %v220, 125
    %v226 = vpop.permute.xlu0 %225
    %v229 = vadd.f32 %v201, %v224
    %v230 = vadd.f32 %v202, %v226
    %s231 = sld [smem:[#allocation3 + $0x18]]
    %v232 = vstv %s231
    %v233 = vmul.f32 %v147, %v232
    %v234 = vmul.f32 %v148, %v232
    %237 = vrot.lane.b32.xlu0 %v233, 125
    %v238 = vpop.permute.xlu0 %237
    %239 = vrot.lane.b32.xlu0 %v234, 125
    %v240 = vpop.permute.xlu0 %239
    %v243 = vadd.f32 %v215, %v238
    %v244 = vadd.f32 %v216, %v240
    %v245 = vld [vmem:[%s0 + $0x2] sm:$0xff]
    %v246 = vld [vmem:[%s0 + $0xa] sm:$0x7f]
    %s247 = sld [smem:[#allocation3 + $0x7]]
    %v248 = vstv %s247
    %v249 = vmul.f32 %v245, %v248
    %v250 = vmul.f32 %v246, %v248
    %v251 = vadd.f32 %v229, %v249
    %v252 = vadd.f32 %v230, %v250
    %s253 = sld [smem:[#allocation3 + $0x17]]
    %v254 = vstv %s253
    %v255 = vmul.f32 %v245, %v254
    %v256 = vmul.f32 %v246, %v254
    %v257 = vadd.f32 %v243, %v255
    %v258 = vadd.f32 %v244, %v256
    %s259 = sld [smem:[#allocation3 + $0x6]]
    %v260 = vstv %s259
    %v261 = vmul.f32 %v245, %v260
    %v262 = vmul.f32 %v246, %v260
    %265 = vrot.lane.b32.xlu0 %v261, 127
    %v266 = vpop.permute.xlu0 %265
    %267 = vrot.lane.b32.xlu0 %v262, 127
    %v268 = vpop.permute.xlu0 %267
    %v271 = vadd.f32 %v251, %v266
    %v272 = vadd.f32 %v252, %v268
    %s273 = sld [smem:[#allocation3 + $0x16]]
    %v274 = vstv %s273
    %v275 = vmul.f32 %v245, %v274
    %v276 = vmul.f32 %v246, %v274
    %279 = vrot.lane.b32.xlu0 %v275, 127
    %v280 = vpop.permute.xlu0 %279
    %281 = vrot.lane.b32.xlu0 %v276, 127
    %v282 = vpop.permute.xlu0 %281
    %v285 = vadd.f32 %v257, %v280
    %v286 = vadd.f32 %v258, %v282
    %s287 = sld [smem:[#allocation3 + $0x5]]
    %v288 = vstv %s287
    %v289 = vmul.f32 %v245, %v288
    %v290 = vmul.f32 %v246, %v288
    %293 = vrot.lane.b32.xlu0 %v289, 126
    %v294 = vpop.permute.xlu0 %293
    %295 = vrot.lane.b32.xlu0 %v290, 126
    %v296 = vpop.permute.xlu0 %295
    %v299 = vadd.f32 %v271, %v294
    %v300 = vadd.f32 %v272, %v296
    %s301 = sld [smem:[#allocation3 + $0x15]]
    %v302 = vstv %s301
    %v303 = vmul.f32 %v245, %v302
    %v304 = vmul.f32 %v246, %v302
    %307 = vrot.lane.b32.xlu0 %v303, 126
    %v308 = vpop.permute.xlu0 %307
    %309 = vrot.lane.b32.xlu0 %v304, 126
    %v310 = vpop.permute.xlu0 %309
    %v313 = vadd.f32 %v285, %v308
    %v314 = vadd.f32 %v286, %v310
    %s315 = sld [smem:[#allocation3 + $0x4]]
    %v316 = vstv %s315
    %v317 = vmul.f32 %v245, %v316
    %v318 = vmul.f32 %v246, %v316
    %321 = vrot.lane.b32.xlu0 %v317, 125
    %v322 = vpop.permute.xlu0 %321
    %323 = vrot.lane.b32.xlu0 %v318, 125
    %v324 = vpop.permute.xlu0 %323
    %v327 = vadd.f32 %v299, %v322
    %v328 = vadd.f32 %v300, %v324
    %s329 = sld [smem:[#allocation3 + $0x14]]
    %v330 = vstv %s329
    %v331 = vmul.f32 %v245, %v330
    %v332 = vmul.f32 %v246, %v330
    %335 = vrot.lane.b32.xlu0 %v331, 125
    %v336 = vpop.permute.xlu0 %335
    %337 = vrot.lane.b32.xlu0 %v332, 125
    %v338 = vpop.permute.xlu0 %337
    %v341 = vadd.f32 %v313, %v336
    %v342 = vadd.f32 %v314, %v338
    %v343 = vld [vmem:[%s0 + $0x3] sm:$0xff]
    %v344 = vld [vmem:[%s0 + $0xb] sm:$0x7f]
    %s345 = sld [smem:[#allocation3 + $0x3]]
    %v346 = vstv %s345
    %v347 = vmul.f32 %v343, %v346
    %v348 = vmul.f32 %v344, %v346
    %v349 = vadd.f32 %v327, %v347
    %v350 = vadd.f32 %v328, %v348
    %s351 = sld [smem:[#allocation3 + $0x13]]
    %v352 = vstv %s351
    %v353 = vmul.f32 %v343, %v352
    %v354 = vmul.f32 %v344, %v352
    %v355 = vadd.f32 %v341, %v353
    %v356 = vadd.f32 %v342, %v354
    %s357 = sld [smem:[#allocation3 + $0x2]]
    %v358 = vstv %s357
    %v359 = vmul.f32 %v343, %v358
    %v360 = vmul.f32 %v344, %v358
    %363 = vrot.lane.b32.xlu0 %v359, 127
    %v364 = vpop.permute.xlu0 %363
    %365 = vrot.lane.b32.xlu0 %v360, 127
    %v366 = vpop.permute.xlu0 %365
    %v369 = vadd.f32 %v349, %v364
    %v370 = vadd.f32 %v350, %v366
    %s371 = sld [smem:[#allocation3 + $0x12]]
    %v372 = vstv %s371
    %v373 = vmul.f32 %v343, %v372
    %v374 = vmul.f32 %v344, %v372
    %377 = vrot.lane.b32.xlu0 %v373, 127
    %v378 = vpop.permute.xlu0 %377
    %379 = vrot.lane.b32.xlu0 %v374, 127
    %v380 = vpop.permute.xlu0 %379
    %v383 = vadd.f32 %v355, %v378
    %v384 = vadd.f32 %v356, %v380
    %s385 = sld [smem:[#allocation3 + $0x1]]
    %v386 = vstv %s385
    %v387 = vmul.f32 %v343, %v386
    %v388 = vmul.f32 %v344, %v386
    %391 = vrot.lane.b32.xlu0 %v387, 126
    %v392 = vpop.permute.xlu0 %391
    %393 = vrot.lane.b32.xlu0 %v388, 126
    %v394 = vpop.permute.xlu0 %393
    %v397 = vadd.f32 %v369, %v392
    %v398 = vadd.f32 %v370, %v394
    %s399 = sld [smem:[#allocation3 + $0x11]]
    %v400 = vstv %s399
    %v401 = vmul.f32 %v343, %v400
    %v402 = vmul.f32 %v344, %v400
    %405 = vrot.lane.b32.xlu0 %v401, 126
    %v406 = vpop.permute.xlu0 %405
    %407 = vrot.lane.b32.xlu0 %v402, 126
    %v408 = vpop.permute.xlu0 %407
    %v411 = vadd.f32 %v383, %v406
    %v412 = vadd.f32 %v384, %v408
    %s413 = sld [smem:[#allocation3]]
    %v414 = vstv %s413
    %v415 = vmul.f32 %v343, %v414
    %v416 = vmul.f32 %v344, %v414
    %419 = vrot.lane.b32.xlu0 %v415, 125
    %v420 = vpop.permute.xlu0 %419
    %421 = vrot.lane.b32.xlu0 %v416, 125
    %v422 = vpop.permute.xlu0 %421
    %v425 = vadd.f32 %v397, %v420
    %v426 = vadd.f32 %v398, %v422
    %s427 = sld [smem:[#allocation3 + $0x10]]
    %v428 = vstv %s427
    %v429 = vmul.f32 %v343, %v428
    %v430 = vmul.f32 %v344, %v428
    %433 = vrot.lane.b32.xlu0 %v429, 125
    %v434 = vpop.permute.xlu0 %433
    %435 = vrot.lane.b32.xlu0 %v430, 125
    %v436 = vpop.permute.xlu0 %435
    %v439 = vadd.f32 %v411, %v434
    %v440 = vadd.f32 %v412, %v436
    %v441 = vxor.u32 %v425, 2147483648
    %v442 = vxor.u32 %v426, 2147483648
    %v443 = vmul.f32 %v441, 1.442695
    %v444 = vpow.pop %v443
    %v445 = vmul.f32 %v442, 1.442695
    %v446 = vpow.pop %v445
    %v447 = vadd.f32 %v444, 1.0
    %v448 = vadd.f32 %v446, 1.0
    %v449 = vrcp.pop %v447
    %v450 = vmul.f32 1.0, %v449
    %v451 = vrcp.pop %v448
    %v452 = vmul.f32 1.0, %v451
    %453 = vst.msk [vmem:[#allocation2 + $0x8] sm:$0xff] %vm39, %v450
    %vm454 = vcmask 120832
    %455 = vst.msk [vmem:[#allocation2 + $0x10] sm:$0x7f] %vm454, %v452
    %v456 = vxor.u32 %v439, 2147483648
    %v457 = vxor.u32 %v440, 2147483648
    %v458 = vmul.f32 %v456, 1.442695
    %v459 = vpow.pop %v458
    %v460 = vmul.f32 %v457, 1.442695
    %v461 = vpow.pop %v460
    %v462 = vadd.f32 %v459, 1.0
    %v463 = vadd.f32 %v461, 1.0
    %v464 = vrcp.pop %v462
    %v465 = vmul.f32 1.0, %v464
    %v466 = vrcp.pop %v463
    %v467 = vmul.f32 1.0, %v466
    %s468 = scalar_lea.vmem [#allocation2], 32
    %469 = vst.msk [vmem:[%s468 + $0x8] sm:$0xff] %vm39, %v465
    %470 = vst.msk [vmem:[%s468 + $0x10] sm:$0x7f] %vm454, %v467
    %v471 = vld [vmem:[#allocation2 + $0x3] sm:$0xff]
    %v472 = vld [vmem:[#allocation2 + $0xb] sm:$0xff]
    %v473 = vld [vmem:[#allocation2 + $0x13] sm:$0xf]
    %s474 = sld [smem:[#allocation5 + $0x5]]
    %v475 = vstv %s474
    %v476 = vmul.f32 %v471, %v475
    %v477 = vmul.f32 %v472, %v475
    %v478 = vmul.f32 %v473, %v475
    %v479 = vadd.f32 %v476, 0.0
    %v480 = vadd.f32 %v477, 0.0
    %v481 = vadd.f32 %v478, 0.0
    %s482 = sld [smem:[#allocation5 + $0xb]]
    %v483 = vstv %s482
    %v484 = vmul.f32 %v471, %v483
    %v485 = vmul.f32 %v472, %v483
    %v486 = vmul.f32 %v473, %v483
    %v487 = vadd.f32 %v484, 0.0
    %v488 = vadd.f32 %v485, 0.0
    %v489 = vadd.f32 %v486, 0.0
    %v490 = vld [vmem:[#allocation2 + $0x4] sm:$0xff]
    %v491 = vld [vmem:[#allocation2 + $0xc] sm:$0xff]
    %v492 = vld [vmem:[#allocation2 + $0x14] sm:$0xf]
    %s493 = sld [smem:[#allocation5 + $0x4]]
    %v494 = vstv %s493
    %v495 = vmul.f32 %v490, %v494
    %v496 = vmul.f32 %v491, %v494
    %v497 = vmul.f32 %v492, %v494
    %v498 = vadd.f32 %v479, %v495
    %v499 = vadd.f32 %v480, %v496
    %v500 = vadd.f32 %v481, %v497
    %s501 = sld [smem:[#allocation5 + $0xa]]
    %v502 = vstv %s501
    %v503 = vmul.f32 %v490, %v502
    %v504 = vmul.f32 %v491, %v502
    %v505 = vmul.f32 %v492, %v502
    %v506 = vadd.f32 %v487, %v503
    %v507 = vadd.f32 %v488, %v504
    %v508 = vadd.f32 %v489, %v505
    %v509 = vld [vmem:[#allocation2 + $0x5] sm:$0xff]
    %v510 = vld [vmem:[#allocation2 + $0xd] sm:$0xff]
    %v511 = vld [vmem:[#allocation2 + $0x15] sm:$0xf]
    %s512 = sld [smem:[#allocation5 + $0x3]]
    %v513 = vstv %s512
    %v514 = vmul.f32 %v509, %v513
    %v515 = vmul.f32 %v510, %v513
    %v516 = vmul.f32 %v511, %v513
    %v517 = vadd.f32 %v498, %v514
    %v518 = vadd.f32 %v499, %v515
    %v519 = vadd.f32 %v500, %v516
    %s520 = sld [smem:[#allocation5 + $0x9]]
    %v521 = vstv %s520
    %v522 = vmul.f32 %v509, %v521
    %v523 = vmul.f32 %v510, %v521
    %v524 = vmul.f32 %v511, %v521
    %v525 = vadd.f32 %v506, %v522
    %v526 = vadd.f32 %v507, %v523
    %v527 = vadd.f32 %v508, %v524
    %v528 = vld [vmem:[#allocation2 + $0x6] sm:$0xff]
    %v529 = vld [vmem:[#allocation2 + $0xe] sm:$0xff]
    %v530 = vld [vmem:[#allocation2 + $0x16] sm:$0xf]
    %s531 = sld [smem:[#allocation5 + $0x2]]
    %v532 = vstv %s531
    %v533 = vmul.f32 %v528, %v532
    %v534 = vmul.f32 %v529, %v532
    %v535 = vmul.f32 %v530, %v532
    %v536 = vadd.f32 %v517, %v533
    %v537 = vadd.f32 %v518, %v534
    %v538 = vadd.f32 %v519, %v535
    %s539 = sld [smem:[#allocation5 + $0x8]]
    %v540 = vstv %s539
    %v541 = vmul.f32 %v528, %v540
    %v542 = vmul.f32 %v529, %v540
    %v543 = vmul.f32 %v530, %v540
    %v544 = vadd.f32 %v525, %v541
    %v545 = vadd.f32 %v526, %v542
    %v546 = vadd.f32 %v527, %v543
    %v547 = vld [vmem:[#allocation2 + $0x7] sm:$0xff]
    %v548 = vld [vmem:[#allocation2 + $0xf] sm:$0xff]
    %v549 = vld [vmem:[#allocation2 + $0x17] sm:$0xf]
    %s550 = sld [smem:[#allocation5 + $0x1]]
    %v551 = vstv %s550
    %v552 = vmul.f32 %v547, %v551
    %v553 = vmul.f32 %v548, %v551
    %v554 = vmul.f32 %v549, %v551
    %v555 = vadd.f32 %v536, %v552
    %v556 = vadd.f32 %v537, %v553
    %v557 = vadd.f32 %v538, %v554
    %s558 = sld [smem:[#allocation5 + $0x7]]
    %v559 = vstv %s558
    %v560 = vmul.f32 %v547, %v559
    %v561 = vmul.f32 %v548, %v559
    %v562 = vmul.f32 %v549, %v559
    %v563 = vadd.f32 %v544, %v560
    %v564 = vadd.f32 %v545, %v561
    %v565 = vadd.f32 %v546, %v562
    %v566 = vld [vmem:[#allocation2 + $0x8] sm:$0xff]
    %v567 = vld [vmem:[#allocation2 + $0x10] sm:$0xff]
    %v568 = vld [vmem:[#allocation2 + $0x18] sm:$0xf]
    %s569 = sld [smem:[#allocation5]]
    %v570 = vstv %s569
    %v571 = vmul.f32 %v566, %v570
    %v572 = vmul.f32 %v567, %v570
    %v573 = vmul.f32 %v568, %v570
    %v574 = vadd.f32 %v555, %v571
    %v575 = vadd.f32 %v556, %v572
    %v576 = vadd.f32 %v557, %v573
    %s577 = sld [smem:[#allocation5 + $0x6]]
    %v578 = vstv %s577
    %v579 = vmul.f32 %v566, %v578
    %v580 = vmul.f32 %v567, %v578
    %v581 = vmul.f32 %v568, %v578
    %v582 = vadd.f32 %v563, %v579
    %v583 = vadd.f32 %v564, %v580
    %v584 = vadd.f32 %v565, %v581
    %v585 = vxor.u32 %v574, 2147483648
    %v586 = vxor.u32 %v575, 2147483648
    %v587 = vxor.u32 %v576, 2147483648
    %v588 = vmul.f32 %v585, 1.442695
    %v589 = vpow.pop %v588
    %v590 = vmul.f32 %v586, 1.442695
    %v591 = vpow.pop %v590
    %v592 = vmul.f32 %v587, 1.442695
    %v593 = vpow.pop %v592
    %v594 = vadd.f32 %v589, 1.0
    %v595 = vadd.f32 %v591, 1.0
    %v596 = vadd.f32 %v593, 1.0
    %v597 = vrcp.pop %v594
    %v598 = vmul.f32 1.0, %v597
    %v599 = vrcp.pop %v595
    %v600 = vmul.f32 1.0, %v599
    %v601 = vrcp.pop %v596
    %v602 = vmul.f32 1.0, %v601
    %603 = vst.msk [vmem:[%s3] sm:$0xff] %vm39, %v598
    %604 = vst.msk [vmem:[%s3 + $0x8] sm:$0xff] %vm39, %v600
    %605 = vst.msk [vmem:[%s3 + $0x10] sm:$0xf] %vm43, %v602
    %v606 = vxor.u32 %v582, 2147483648
    %v607 = vxor.u32 %v583, 2147483648
    %v608 = vxor.u32 %v584, 2147483648
    %v609 = vmul.f32 %v606, 1.442695
    %v610 = vpow.pop %v609
    %v611 = vmul.f32 %v607, 1.442695
    %v612 = vpow.pop %v611
    %v613 = vmul.f32 %v608, 1.442695
    %v614 = vpow.pop %v613
    %v615 = vadd.f32 %v610, 1.0
    %v616 = vadd.f32 %v612, 1.0
    %v617 = vadd.f32 %v614, 1.0
    %v618 = vrcp.pop %v615
    %v619 = vmul.f32 1.0, %v618
    %v620 = vrcp.pop %v616
    %v621 = vmul.f32 1.0, %v620
    %v622 = vrcp.pop %v617
    %v623 = vmul.f32 1.0, %v622
    %s624 = scalar_lea.vmem %s3, 24
    %625 = vst.msk [vmem:[%s624] sm:$0xff] %vm39, %v619
    %626 = vst.msk [vmem:[%s624 + $0x8] sm:$0xff] %vm39, %v621
    %627 = vst.msk [vmem:[%s624 + $0x10] sm:$0xf] %vm43, %v623
    %v628 = vld [vmem:[%s468 + $0x3] sm:$0xff]
    %v629 = vld [vmem:[%s468 + $0xb] sm:$0xff]
    %v630 = vld [vmem:[%s468 + $0x13] sm:$0xf]
    %s631 = sld [smem:[#allocation5 + $0x5]]
    %v632 = vstv %s631
    %v633 = vmul.f32 %v628, %v632
    %v634 = vmul.f32 %v629, %v632
    %v635 = vmul.f32 %v630, %v632
    %v636 = vadd.f32 %v633, 0.0
    %v637 = vadd.f32 %v634, 0.0
    %v638 = vadd.f32 %v635, 0.0
    %s639 = sld [smem:[#allocation5 + $0xb]]
    %v640 = vstv %s639
    %v641 = vmul.f32 %v628, %v640
    %v642 = vmul.f32 %v629, %v640
    %v643 = vmul.f32 %v630, %v640
    %v644 = vadd.f32 %v641, 0.0
    %v645 = vadd.f32 %v642, 0.0
    %v646 = vadd.f32 %v643, 0.0
    %v647 = vld [vmem:[%s468 + $0x4] sm:$0xff]
    %v648 = vld [vmem:[%s468 + $0xc] sm:$0xff]
    %v649 = vld [vmem:[%s468 + $0x14] sm:$0xf]
    %s650 = sld [smem:[#allocation5 + $0x4]]
    %v651 = vstv %s650
    %v652 = vmul.f32 %v647, %v651
    %v653 = vmul.f32 %v648, %v651
    %v654 = vmul.f32 %v649, %v651
    %v655 = vadd.f32 %v636, %v652
    %v656 = vadd.f32 %v637, %v653
    %v657 = vadd.f32 %v638, %v654
    %s658 = sld [smem:[#allocation5 + $0xa]]
    %v659 = vstv %s658
    %v660 = vmul.f32 %v647, %v659
    %v661 = vmul.f32 %v648, %v659
    %v662 = vmul.f32 %v649, %v659
    %v663 = vadd.f32 %v644, %v660
    %v664 = vadd.f32 %v645, %v661
    %v665 = vadd.f32 %v646, %v662
    %v666 = vld [vmem:[%s468 + $0x5] sm:$0xff]
    %v667 = vld [vmem:[%s468 + $0xd] sm:$0xff]
    %v668 = vld [vmem:[%s468 + $0x15] sm:$0xf]
    %s669 = sld [smem:[#allocation5 + $0x3]]
    %v670 = vstv %s669
    %v671 = vmul.f32 %v666, %v670
    %v672 = vmul.f32 %v667, %v670
    %v673 = vmul.f32 %v668, %v670
    %v674 = vadd.f32 %v655, %v671
    %v675 = vadd.f32 %v656, %v672
    %v676 = vadd.f32 %v657, %v673
    %s677 = sld [smem:[#allocation5 + $0x9]]
    %v678 = vstv %s677
    %v679 = vmul.f32 %v666, %v678
    %v680 = vmul.f32 %v667, %v678
    %v681 = vmul.f32 %v668, %v678
    %v682 = vadd.f32 %v663, %v679
    %v683 = vadd.f32 %v664, %v680
    %v684 = vadd.f32 %v665, %v681
    %v685 = vld [vmem:[%s468 + $0x6] sm:$0xff]
    %v686 = vld [vmem:[%s468 + $0xe] sm:$0xff]
    %v687 = vld [vmem:[%s468 + $0x16] sm:$0xf]
    %s688 = sld [smem:[#allocation5 + $0x2]]
    %v689 = vstv %s688
    %v690 = vmul.f32 %v685, %v689
    %v691 = vmul.f32 %v686, %v689
    %v692 = vmul.f32 %v687, %v689
    %v693 = vadd.f32 %v674, %v690
    %v694 = vadd.f32 %v675, %v691
    %v695 = vadd.f32 %v676, %v692
    %s696 = sld [smem:[#allocation5 + $0x8]]
    %v697 = vstv %s696
    %v698 = vmul.f32 %v685, %v697
    %v699 = vmul.f32 %v686, %v697
    %v700 = vmul.f32 %v687, %v697
    %v701 = vadd.f32 %v682, %v698
    %v702 = vadd.f32 %v683, %v699
    %v703 = vadd.f32 %v684, %v700
    %v704 = vld [vmem:[%s468 + $0x7] sm:$0xff]
    %v705 = vld [vmem:[%s468 + $0xf] sm:$0xff]
    %v706 = vld [vmem:[%s468 + $0x17] sm:$0xf]
    %s707 = sld [smem:[#allocation5 + $0x1]]
    %v708 = vstv %s707
    %v709 = vmul.f32 %v704, %v708
    %v710 = vmul.f32 %v705, %v708
    %v711 = vmul.f32 %v706, %v708
    %v712 = vadd.f32 %v693, %v709
    %v713 = vadd.f32 %v694, %v710
    %v714 = vadd.f32 %v695, %v711
    %s715 = sld [smem:[#allocation5 + $0x7]]
    %v716 = vstv %s715
    %v717 = vmul.f32 %v704, %v716
    %v718 = vmul.f32 %v705, %v716
    %v719 = vmul.f32 %v706, %v716
    %v720 = vadd.f32 %v701, %v717
    %v721 = vadd.f32 %v702, %v718
    %v722 = vadd.f32 %v703, %v719
    %v723 = vld [vmem:[%s468 + $0x8] sm:$0xff]
    %v724 = vld [vmem:[%s468 + $0x10] sm:$0xff]
    %v725 = vld [vmem:[%s468 + $0x18] sm:$0xf]
    %s726 = sld [smem:[#allocation5]]
    %v727 = vstv %s726
    %v728 = vmul.f32 %v723, %v727
    %v729 = vmul.f32 %v724, %v727
    %v730 = vmul.f32 %v725, %v727
    %v731 = vadd.f32 %v712, %v728
    %v732 = vadd.f32 %v713, %v729
    %v733 = vadd.f32 %v714, %v730
    %s734 = sld [smem:[#allocation5 + $0x6]]
    %v735 = vstv %s734
    %v736 = vmul.f32 %v723, %v735
    %v737 = vmul.f32 %v724, %v735
    %v738 = vmul.f32 %v725, %v735
    %v739 = vadd.f32 %v720, %v736
    %v740 = vadd.f32 %v721, %v737
    %v741 = vadd.f32 %v722, %v738
    %v742 = vxor.u32 %v731, 2147483648
    %v743 = vxor.u32 %v732, 2147483648
    %v744 = vxor.u32 %v733, 2147483648
    %v745 = vmul.f32 %v742, 1.442695
    %v746 = vpow.pop %v745
    %v747 = vmul.f32 %v743, 1.442695
    %v748 = vpow.pop %v747
    %v749 = vmul.f32 %v744, 1.442695
    %v750 = vpow.pop %v749
    %v751 = vadd.f32 %v746, 1.0
    %v752 = vadd.f32 %v748, 1.0
    %v753 = vadd.f32 %v750, 1.0
    %v754 = vrcp.pop %v751
    %v755 = vmul.f32 1.0, %v754
    %v756 = vrcp.pop %v752
    %v757 = vmul.f32 1.0, %v756
    %v758 = vrcp.pop %v753
    %v759 = vmul.f32 1.0, %v758
    %s760 = scalar_lea.vmem %s3, 48
    %761 = vst.msk [vmem:[%s760] sm:$0xff] %vm39, %v755
    %762 = vst.msk [vmem:[%s760 + $0x8] sm:$0xff] %vm39, %v757
    %763 = vst.msk [vmem:[%s760 + $0x10] sm:$0xf] %vm43, %v759
    %v764 = vxor.u32 %v739, 2147483648
    %v765 = vxor.u32 %v740, 2147483648
    %v766 = vxor.u32 %v741, 2147483648
    %v767 = vmul.f32 %v764, 1.442695
    %v768 = vpow.pop %v767
    %v769 = vmul.f32 %v765, 1.442695
    %v770 = vpow.pop %v769
    %v771 = vmul.f32 %v766, 1.442695
    %v772 = vpow.pop %v771
    %v773 = vadd.f32 %v768, 1.0
    %v774 = vadd.f32 %v770, 1.0
    %v775 = vadd.f32 %v772, 1.0
    %v776 = vrcp.pop %v773
    %v777 = vmul.f32 1.0, %v776
    %v778 = vrcp.pop %v774
    %v779 = vmul.f32 1.0, %v778
    %v780 = vrcp.pop %v775
    %v781 = vmul.f32 1.0, %v780
    %s782 = scalar_lea.vmem %s3, 72
    %783 = vst.msk [vmem:[%s782] sm:$0xff] %vm39, %v777
    %784 = vst.msk [vmem:[%s782 + $0x8] sm:$0xff] %vm39, %v779
    %785 = vst.msk [vmem:[%s782 + $0x10] sm:$0xf] %vm43, %v781
    // Predicated region
    $region22: #{model_forward.1} parent=1 // pred_check
      _
    $region23: #{model_forward.1} parent=1 // pred_check_branch
      %787 = sbr.rel (0) target = $region25
    $region24: #{model_forward.1} parent=1 // pred_region
      _
    $region25: #{model_forward.1} parent=1 // pred_fallthru
      _
    // Predicated region
    $region26: #{model_forward.1} parent=1 // pred_check
      _
    $region27: #{model_forward.1} parent=1 // pred_check_branch
      %789 = sbr.rel (0) target = $region29
    $region28: #{model_forward.1} parent=1 // pred_region
      _
    $region29: #{model_forward.1} parent=1 // pred_fallthru
      _
    %790 = vsyncpa [#allocation4], 1
    %791 = vsyncpa [#allocation6], 1

</llo_original>
